<compile_context>
chip_gen: v7x
topology: tpu7x:2x2x1
jax: 0.10.0
libtpu: 0.0.40
codegen_flags: <defaults>
</compile_context>

<pallas_src>
import functools

import jax
import jax.numpy as jnp
from jax.experimental import pallas as pl
from jax.experimental.pallas import tpu as pltpu


def _round_up(x: int, m: int) -> int:
    return ((x + m - 1) // m) * m


def _char_sum_kernel(idx_ref, table_ref, out_ref, *, scale: float):
    # idx_ref   : (F, TN)        int32   char indices for this tile (lane-dense in N)
    # table_ref : (D_pad, V_pad) float   transposed + padded char2vec table (VMEM resident)
    # out_ref   : (D_pad, TN)    float   summed & scaled vectors for this tile
    num_chars, tn = idx_ref.shape
    _, v_pad = table_ref.shape

    idx = idx_ref[...]                                             # (F, TN)
    iota_v = jax.lax.broadcasted_iota(jnp.int32, (v_pad, tn), 0)   # (V_pad, TN)

    # counts[v, n] = number of f with idx[f, n] == v  (sum of one-hots over the F chars)
    counts = jnp.zeros((v_pad, tn), dtype=table_ref.dtype)
    for f in range(num_chars):                                     # F is small & static
        counts = counts + (iota_v == idx[f:f + 1, :]).astype(table_ref.dtype)

    # (D_pad, V_pad) @ (V_pad, TN) -> (D_pad, TN) on the MXU; accumulate in f32.
    acc = jnp.dot(table_ref[...], counts, preferred_element_type=jnp.float32)
    out_ref[...] = (acc * scale).astype(out_ref.dtype)


def char_to_vector(x, table, *, tile_n: int = 512, scale: float = 0.1):
    """x: int [B, T, F] char indices; table: float [V, D] char2vec. Returns [B, T, D].

    output[b, t] = (sum_f table[x[b, t, f]]) * scale   (the module hardcodes scale = 1/10)
    """
    B, T, F = x.shape
    V, D = table.shape
    N = B * T

    # TPU-friendly padded sizes.
    d_pad = _round_up(max(D, 1), 8)    # sublane dim of the (transposed) output
    v_pad = _round_up(V, 128)          # lane dim of the one-hot / contraction dim
    n_min = _round_up(N, 128)

    # Large tiles over N amortize per-grid-step overhead, but keep >= 2 grid steps
    # when there is enough work so v7x's two TensorCores both get a share.
    tile_n = min(_round_up(tile_n, 128), n_min)
    if n_min // tile_n < 2 and n_min >= 256:
        tile_n = _round_up(n_min // 2, 128)
    n_pad = _round_up(N, tile_n)
    grid = (n_pad // tile_n,)

    # Lane-dense index layout: (F, N_pad). Padded columns use index 0; they only feed
    # padded output columns, which are sliced off below.
    idx = x.reshape(N, F).astype(jnp.int32)
    idx_t = jnp.zeros((F, n_pad), jnp.int32).at[:, :N].set(idx.T)

    # Transposed + padded table: (D_pad, V_pad); padding rows/cols are zero.
    table_t = jnp.zeros((d_pad, v_pad), table.dtype).at[:D, :V].set(table.T)

    out_t = pl.pallas_call(
        functools.partial(_char_sum_kernel, scale=scale),
        out_shape=jax.ShapeDtypeStruct((d_pad, n_pad), table.dtype),
        grid_spec=pltpu.PrefetchScalarGridSpec(
            num_scalar_prefetch=0,
            grid=grid,
            in_specs=[
                # Index tile: lane-dense (F sublanes x tile_n lanes) DMA per step.
                pl.BlockSpec((F, tile_n), lambda i: (0, i)),
                # Full char2vec table resident in VMEM once (no per-step DMA,
                # no double buffering).
                pl.BlockSpec(memory_space=pltpu.MemorySpace.VMEM),
            ],
            out_specs=pl.BlockSpec((d_pad, tile_n), lambda i: (0, i)),
        ),
        compiler_params=pltpu.CompilerParams(
            dimension_semantics=("parallel",),
        ),
    )(idx_t, table_t)

    # (D_pad, N_pad) -> (B, T, D); the transpose/slice are tiny XLA ops outside the kernel.
    return out_t[:D, :N].T.reshape(B, T, D)


if __name__ == "__main__":
    # Small shapes consistent with the module's forward loops:
    #   B batches, T timesteps, F=10 chars per timestep (the module divides by 10),
    #   vocab V, embedding dim D=5 (vec = torch.zeros(5) in the module).
    B, T, F = 2, 16, 10
    V, D = 64, 5

    key = jax.random.PRNGKey(0)
    k_tab, k_idx = jax.random.split(key)

    # Deterministic synthetic "char2vec" table (the module loads it from disk).
    table = jax.random.normal(k_tab, (V, D), dtype=jnp.float32)
    # Deterministic synthetic char-index input.
    x = jax.random.randint(k_idx, (B, T, F), minval=0, maxval=V, dtype=jnp.int32)

    out = jax.block_until_ready(char_to_vector(x, table))

    # Reference: gather, sum over the F chars, divide by the constant 10.
    ref = jnp.take(table, x, axis=0).sum(axis=2) / 10.0   # (B, T, D)

    assert out.shape == (B, T, D), out.shape
    assert jnp.allclose(out, ref, atol=1e-5, rtol=1e-5), "mismatch vs reference"

    print("KERNEL_OK")
</pallas_src>

<mosaic_0001>
module attributes {stable_mosaic.version = 11 : i64} {
  func.func @_char_sum_kernel(%arg0: i32, %arg1: memref<10x128xi32, #tpu.memory_space<vmem>>, %arg2: memref<8x128xf32, #tpu.memory_space<vmem>>, %arg3: memref<8x128xf32, #tpu.memory_space<vmem>>) attributes {dimension_semantics = [#tpu.dimension_semantics<parallel>], iteration_bounds = array<i64: 1>, scalar_prefetch = 0 : i64, scratch_operands = 0 : i64, tpu.core_type = #tpu.core_type<tc>, window_params = [{transform_indices = @transform_0, window_bounds = array<i64: 10, 128>}, {pipeline_mode = #tpu.pipeline_mode<synchronous>, transform_indices = @transform_1, window_bounds = array<i64: 8, 128>}, {transform_indices = @transform_2, window_bounds = array<i64: 8, 128>}]} {
    %c0 = arith.constant 0 : index
    %c0_0 = arith.constant 0 : index
    %0 = vector.load %arg1[%c0, %c0_0] : memref<10x128xi32, #tpu.memory_space<vmem>>, vector<10x128xi32>
    %1 = tpu.iota {dimensions = array<i32: 0>} : vector<128x128xi32>
    %cst = arith.constant 0.000000e+00 : f32
    %2 = vector.broadcast %cst : f32 to vector<128x128xf32>
    %3 = vector.extract_strided_slice %0 {offsets = [0, 0], sizes = [1, 128], strides = [1, 1]} : vector<10x128xi32> to vector<1x128xi32>
    %4 = vector.broadcast %3 : vector<1x128xi32> to vector<128x128xi32>
    %5 = arith.cmpi eq, %1, %4 : vector<128x128xi32>
    %6 = arith.extui %5 : vector<128x128xi1> to vector<128x128xi32>
    %7 = arith.sitofp %6 : vector<128x128xi32> to vector<128x128xf32>
    %8 = arith.addf %2, %7 : vector<128x128xf32>
    %9 = vector.extract_strided_slice %0 {offsets = [1, 0], sizes = [1, 128], strides = [1, 1]} : vector<10x128xi32> to vector<1x128xi32>
    %10 = vector.broadcast %9 : vector<1x128xi32> to vector<128x128xi32>
    %11 = arith.cmpi eq, %1, %10 : vector<128x128xi32>
    %12 = arith.extui %11 : vector<128x128xi1> to vector<128x128xi32>
    %13 = arith.sitofp %12 : vector<128x128xi32> to vector<128x128xf32>
    %14 = arith.addf %8, %13 : vector<128x128xf32>
    %15 = vector.extract_strided_slice %0 {offsets = [2, 0], sizes = [1, 128], strides = [1, 1]} : vector<10x128xi32> to vector<1x128xi32>
    %16 = vector.broadcast %15 : vector<1x128xi32> to vector<128x128xi32>
    %17 = arith.cmpi eq, %1, %16 : vector<128x128xi32>
    %18 = arith.extui %17 : vector<128x128xi1> to vector<128x128xi32>
    %19 = arith.sitofp %18 : vector<128x128xi32> to vector<128x128xf32>
    %20 = arith.addf %14, %19 : vector<128x128xf32>
    %21 = vector.extract_strided_slice %0 {offsets = [3, 0], sizes = [1, 128], strides = [1, 1]} : vector<10x128xi32> to vector<1x128xi32>
    %22 = vector.broadcast %21 : vector<1x128xi32> to vector<128x128xi32>
    %23 = arith.cmpi eq, %1, %22 : vector<128x128xi32>
    %24 = arith.extui %23 : vector<128x128xi1> to vector<128x128xi32>
    %25 = arith.sitofp %24 : vector<128x128xi32> to vector<128x128xf32>
    %26 = arith.addf %20, %25 : vector<128x128xf32>
    %27 = vector.extract_strided_slice %0 {offsets = [4, 0], sizes = [1, 128], strides = [1, 1]} : vector<10x128xi32> to vector<1x128xi32>
    %28 = vector.broadcast %27 : vector<1x128xi32> to vector<128x128xi32>
    %29 = arith.cmpi eq, %1, %28 : vector<128x128xi32>
    %30 = arith.extui %29 : vector<128x128xi1> to vector<128x128xi32>
    %31 = arith.sitofp %30 : vector<128x128xi32> to vector<128x128xf32>
    %32 = arith.addf %26, %31 : vector<128x128xf32>
    %33 = vector.extract_strided_slice %0 {offsets = [5, 0], sizes = [1, 128], strides = [1, 1]} : vector<10x128xi32> to vector<1x128xi32>
    %34 = vector.broadcast %33 : vector<1x128xi32> to vector<128x128xi32>
    %35 = arith.cmpi eq, %1, %34 : vector<128x128xi32>
    %36 = arith.extui %35 : vector<128x128xi1> to vector<128x128xi32>
    %37 = arith.sitofp %36 : vector<128x128xi32> to vector<128x128xf32>
    %38 = arith.addf %32, %37 : vector<128x128xf32>
    %39 = vector.extract_strided_slice %0 {offsets = [6, 0], sizes = [1, 128], strides = [1, 1]} : vector<10x128xi32> to vector<1x128xi32>
    %40 = vector.broadcast %39 : vector<1x128xi32> to vector<128x128xi32>
    %41 = arith.cmpi eq, %1, %40 : vector<128x128xi32>
    %42 = arith.extui %41 : vector<128x128xi1> to vector<128x128xi32>
    %43 = arith.sitofp %42 : vector<128x128xi32> to vector<128x128xf32>
    %44 = arith.addf %38, %43 : vector<128x128xf32>
    %45 = vector.extract_strided_slice %0 {offsets = [7, 0], sizes = [1, 128], strides = [1, 1]} : vector<10x128xi32> to vector<1x128xi32>
    %46 = vector.broadcast %45 : vector<1x128xi32> to vector<128x128xi32>
    %47 = arith.cmpi eq, %1, %46 : vector<128x128xi32>
    %48 = arith.extui %47 : vector<128x128xi1> to vector<128x128xi32>
    %49 = arith.sitofp %48 : vector<128x128xi32> to vector<128x128xf32>
    %50 = arith.addf %44, %49 : vector<128x128xf32>
    %51 = vector.extract_strided_slice %0 {offsets = [8, 0], sizes = [1, 128], strides = [1, 1]} : vector<10x128xi32> to vector<1x128xi32>
    %52 = vector.broadcast %51 : vector<1x128xi32> to vector<128x128xi32>
    %53 = arith.cmpi eq, %1, %52 : vector<128x128xi32>
    %54 = arith.extui %53 : vector<128x128xi1> to vector<128x128xi32>
    %55 = arith.sitofp %54 : vector<128x128xi32> to vector<128x128xf32>
    %56 = arith.addf %50, %55 : vector<128x128xf32>
    %57 = vector.extract_strided_slice %0 {offsets = [9, 0], sizes = [1, 128], strides = [1, 1]} : vector<10x128xi32> to vector<1x128xi32>
    %58 = vector.broadcast %57 : vector<1x128xi32> to vector<128x128xi32>
    %59 = arith.cmpi eq, %1, %58 : vector<128x128xi32>
    %60 = arith.extui %59 : vector<128x128xi1> to vector<128x128xi32>
    %61 = arith.sitofp %60 : vector<128x128xi32> to vector<128x128xf32>
    %62 = arith.addf %56, %61 : vector<128x128xf32>
    %c0_1 = arith.constant 0 : index
    %c0_2 = arith.constant 0 : index
    %63 = vector.load %arg2[%c0_1, %c0_2] : memref<8x128xf32, #tpu.memory_space<vmem>>, vector<8x128xf32>
    %cst_3 = arith.constant dense<0.000000e+00> : vector<8x128xf32>
    %64 = tpu.matmul %63, %62, %cst_3 {dimension_numbers = #tpu.dot_dimension_numbers<[1], [0], [0], [1], [0, 0, 1, 1], [], []>} : vector<8x128xf32>, vector<128x128xf32>, vector<8x128xf32> -> vector<8x128xf32>
    %cst_4 = arith.constant 1.000000e-01 : f32
    %65 = vector.broadcast %cst_4 : f32 to vector<8x128xf32>
    %66 = arith.mulf %64, %65 : vector<8x128xf32>
    %c0_5 = arith.constant 0 : index
    %c0_6 = arith.constant 0 : index
    %67 = vector.load %arg3[%c0_5, %c0_6] : memref<8x128xf32, #tpu.memory_space<vmem>>, vector<8x128xf32>
    tpu.vector_store %arg3[%c0_5, %c0_6], %66 {strides = array<i32>} : memref<8x128xf32, #tpu.memory_space<vmem>>, vector<8x128xf32>,
    return
  }
  func.func @transform_0(%arg0: i32) -> (i32, i32) {
    %c0_i32 = arith.constant 0 : i32
    %c0_i32_0 = arith.constant 0 : i32
    return %c0_i32, %arg0 : i32, i32
  }
  func.func @transform_1(%arg0: i32) -> (i32, i32) {
    %c0_i32 = arith.constant 0 : i32
    %c0_i32_0 = arith.constant 0 : i32
    %c0_i32_1 = arith.constant 0 : i32
    return %c0_i32, %c0_i32_0 : i32, i32
  }
  func.func @transform_2(%arg0: i32) -> (i32, i32) {
    %c0_i32 = arith.constant 0 : i32
    %c0_i32_0 = arith.constant 0 : i32
    return %c0_i32, %arg0 : i32, i32
  }
}

</mosaic_0001>

<llo_original>
// kernel: tpu_custom_call.1
$region0: #{tpu_custom_call.1}
  #allocation0 [shape = 'u32[]', space=smem, size = 0x4, offset = 0x4, fixed_abs, tag = 'smem constant byte address 0x4 - core index']
  #allocation1 [shape = 'u32[144,128]{1,0:T(1,128)}', space=vmem, size = 0x12000, scoped, tag = 'internal scratch']
  %s0 = inlined_call_operand.hbm [shape: s32[10,128], index: 0, kind: input, shape index: {}]
  %s1 = inlined_call_operand.hbm [shape: f32[8,128], index: 1, kind: input, shape index: {}]
  %s2 = inlined_call_operand.hbm [shape: f32[8,128], index: 2, kind: output, shape index: {}]
  %s3 = sld [smem:[#allocation0]]
  $region26: #{tpu_custom_call.1} parent=0
    _
  %s5 = ssub.s32 1, %s3
  %s6 = scalar_select 0, %s5, %s3
  $region1: #{tpu_custom_call.1} parent=0
    #allocation2 [shape = 'u8[8192]{0}', space=vmem, size = 0x2000, scoped, tag = 'input window, operand 0, single buffered']
    #allocation3 [shape = 's32[1]{0}', space=sflag, size = 0x4, scoped, tag = 'scoped memory for tpu_custom_call.1']
    #allocation4 [shape = 's32[1]{0}', space=sflag, size = 0x4, scoped, tag = 'scoped memory for tpu_custom_call.1']
    #allocation5 [shape = 'u8[4096]{0}', space=vmem, size = 0x1000, scoped, tag = 'input window, operand 1, single buffered']
    #allocation6 [shape = 's32[1]{0}', space=sflag, size = 0x4, scoped, tag = 'scoped memory for tpu_custom_call.1']
    #allocation7 [shape = 'u8[4096]{0}', space=vmem, size = 0x1000, scoped, tag = 'output window, operand 0, single buffered']
    %7 = vsyncpa [#allocation3], 0
    %8 = vsyncpa [#allocation6], 0
    %9 = vsyncpa [#allocation4], 0
    // Predicated region
    $region2: #{tpu_custom_call.1} parent=1 // pred_check
      _
    $region3: #{tpu_custom_call.1} parent=1 // pred_check_branch
      %11 = sbr.rel (0) target = $region5
    $region4: #{tpu_custom_call.1} parent=1 // pred_region
      %s13 = ssub.s32 256, 256
      %14 = vsyncadd [#allocation3], %s13
      %s15 = sshll.u32 [#allocation2], 4
      %s16 = int_to_ptr.vmem [resolvable:$true] %s15
      %21 = dma.hbm_to_vmem [thread:$0]  %s0, 256, %s16, [#allocation3], 128, 128, 8
    $region5: #{tpu_custom_call.1} parent=1 // pred_fallthru
      _
    // Predicated region
    $region6: #{tpu_custom_call.1} parent=1 // pred_check
      _
    $region7: #{tpu_custom_call.1} parent=1 // pred_check_branch
      %23 = sbr.rel (0) target = $region9
    $region8: #{tpu_custom_call.1} parent=1 // pred_region
      %s25 = ssub.s32 128, 128
      %26 = vsyncadd [#allocation6], %s25
      %s28 = sshll.u32 [#allocation5], 4
      %s29 = int_to_ptr.vmem [resolvable:$true] %s28
      %31 = dma.hbm_to_vmem [thread:$0]  %s1, 128, %s29, [#allocation6]
    $region9: #{tpu_custom_call.1} parent=1 // pred_fallthru
      _
    // Predicated region
    $region10: #{tpu_custom_call.1} parent=1 // pred_check
      _
    $region11: #{tpu_custom_call.1} parent=1 // pred_check_branch
      %33 = sbr.rel (0) target = $region13
    $region12: #{tpu_custom_call.1} parent=1 // pred_region
      %34 = dma.done [#allocation3], 256
    $region13: #{tpu_custom_call.1} parent=1 // pred_fallthru
      _
    // Predicated region
    $region14: #{tpu_custom_call.1} parent=1 // pred_check
      _
    $region15: #{tpu_custom_call.1} parent=1 // pred_check_branch
      %36 = sbr.rel (0) target = $region17
    $region16: #{tpu_custom_call.1} parent=1 // pred_region
      %37 = dma.done [#allocation6], 128
    $region17: #{tpu_custom_call.1} parent=1 // pred_fallthru
      _
    %v38 = vld [vmem:[#allocation2] sm:$0xff]
    %v39 = vld [vmem:[#allocation2 + $0x8] sm:$0x3]
    %v40 = vlaneseq
    %v41 = vshrl.u32 %v40, 7
    %v42 = vadd.s32 %v41, 8
    %v43 = vadd.s32 %v41, 16
    %v44 = vadd.s32 %v41, 24
    %v45 = vadd.s32 %v41, 32
    %v46 = vadd.s32 %v41, 40
    %v47 = vadd.s32 %v41, 48
    %v48 = vadd.s32 %v41, 56
    %v49 = vadd.s32 %v41, 64
    %v50 = vadd.s32 %v41, 72
    %v51 = vadd.s32 %v41, 80
    %v52 = vadd.s32 %v41, 88
    %v53 = vadd.s32 %v41, 96
    %v54 = vadd.s32 %v41, 104
    %v55 = vadd.s32 %v41, 112
    %v56 = vadd.s32 %v41, 120
    %v57 = vlaneseq
    %v58 = vshrl.u32 %v57, 7
    %v59 = vsub.s32 0, %v58
    %v60 = vrot.slane %v38, %v59
    %vm61 = vcmp.eq.s32.totalorder %v41, %v60
    %vm62 = vcmp.eq.s32.totalorder %v42, %v60
    %vm63 = vcmp.eq.s32.totalorder %v43, %v60
    %vm64 = vcmp.eq.s32.totalorder %v44, %v60
    %vm65 = vcmp.eq.s32.totalorder %v45, %v60
    %vm66 = vcmp.eq.s32.totalorder %v46, %v60
    %vm67 = vcmp.eq.s32.totalorder %v47, %v60
    %vm68 = vcmp.eq.s32.totalorder %v48, %v60
    %vm69 = vcmp.eq.s32.totalorder %v49, %v60
    %vm70 = vcmp.eq.s32.totalorder %v50, %v60
    %vm71 = vcmp.eq.s32.totalorder %v51, %v60
    %vm72 = vcmp.eq.s32.totalorder %v52, %v60
    %vm73 = vcmp.eq.s32.totalorder %v53, %v60
    %vm74 = vcmp.eq.s32.totalorder %v54, %v60
    %vm75 = vcmp.eq.s32.totalorder %v55, %v60
    %vm76 = vcmp.eq.s32.totalorder %v56, %v60
    %v77 = vsel %vm61, 1, 0
    %v78 = vsel %vm62, 1, 0
    %v79 = vsel %vm63, 1, 0
    %v80 = vsel %vm64, 1, 0
    %v81 = vsel %vm65, 1, 0
    %v82 = vsel %vm66, 1, 0
    %v83 = vsel %vm67, 1, 0
    %v84 = vsel %vm68, 1, 0
    %v85 = vsel %vm69, 1, 0
    %v86 = vsel %vm70, 1, 0
    %v87 = vsel %vm71, 1, 0
    %v88 = vsel %vm72, 1, 0
    %v89 = vsel %vm73, 1, 0
    %v90 = vsel %vm74, 1, 0
    %v91 = vsel %vm75, 1, 0
    %v92 = vsel %vm76, 1, 0
    %v93 = vcvt.s32.f32 %v77
    %v94 = vcvt.s32.f32 %v78
    %v95 = vcvt.s32.f32 %v79
    %v96 = vcvt.s32.f32 %v80
    %v97 = vcvt.s32.f32 %v81
    %v98 = vcvt.s32.f32 %v82
    %v99 = vcvt.s32.f32 %v83
    %v100 = vcvt.s32.f32 %v84
    %v101 = vcvt.s32.f32 %v85
    %v102 = vcvt.s32.f32 %v86
    %v103 = vcvt.s32.f32 %v87
    %v104 = vcvt.s32.f32 %v88
    %v105 = vcvt.s32.f32 %v89
    %v106 = vcvt.s32.f32 %v90
    %v107 = vcvt.s32.f32 %v91
    %v108 = vcvt.s32.f32 %v92
    %v109 = vadd.f32 %v93, 0.0
    %v110 = vadd.f32 %v94, 0.0
    %v111 = vadd.f32 %v95, 0.0
    %v112 = vadd.f32 %v96, 0.0
    %v113 = vadd.f32 %v97, 0.0
    %v114 = vadd.f32 %v98, 0.0
    %v115 = vadd.f32 %v99, 0.0
    %v116 = vadd.f32 %v100, 0.0
    %v117 = vadd.f32 %v101, 0.0
    %v118 = vadd.f32 %v102, 0.0
    %v119 = vadd.f32 %v103, 0.0
    %v120 = vadd.f32 %v104, 0.0
    %v121 = vadd.f32 %v105, 0.0
    %v122 = vadd.f32 %v106, 0.0
    %v123 = vadd.f32 %v107, 0.0
    %v124 = vadd.f32 %v108, 0.0
    %v125 = vlaneseq
    %v126 = vshrl.u32 %v125, 7
    %v127 = vsub.s32 1, %v126
    %v128 = vrot.slane %v38, %v127
    %vm129 = vcmp.eq.s32.totalorder %v41, %v128
    %vm130 = vcmp.eq.s32.totalorder %v42, %v128
    %vm131 = vcmp.eq.s32.totalorder %v43, %v128
    %vm132 = vcmp.eq.s32.totalorder %v44, %v128
    %vm133 = vcmp.eq.s32.totalorder %v45, %v128
    %vm134 = vcmp.eq.s32.totalorder %v46, %v128
    %vm135 = vcmp.eq.s32.totalorder %v47, %v128
    %vm136 = vcmp.eq.s32.totalorder %v48, %v128
    %vm137 = vcmp.eq.s32.totalorder %v49, %v128
    %vm138 = vcmp.eq.s32.totalorder %v50, %v128
    %vm139 = vcmp.eq.s32.totalorder %v51, %v128
    %vm140 = vcmp.eq.s32.totalorder %v52, %v128
    %vm141 = vcmp.eq.s32.totalorder %v53, %v128
    %vm142 = vcmp.eq.s32.totalorder %v54, %v128
    %vm143 = vcmp.eq.s32.totalorder %v55, %v128
    %vm144 = vcmp.eq.s32.totalorder %v56, %v128
    %v145 = vsel %vm129, 1, 0
    %v146 = vsel %vm130, 1, 0
    %v147 = vsel %vm131, 1, 0
    %v148 = vsel %vm132, 1, 0
    %v149 = vsel %vm133, 1, 0
    %v150 = vsel %vm134, 1, 0
    %v151 = vsel %vm135, 1, 0
    %v152 = vsel %vm136, 1, 0
    %v153 = vsel %vm137, 1, 0
    %v154 = vsel %vm138, 1, 0
    %v155 = vsel %vm139, 1, 0
    %v156 = vsel %vm140, 1, 0
    %v157 = vsel %vm141, 1, 0
    %v158 = vsel %vm142, 1, 0
    %v159 = vsel %vm143, 1, 0
    %v160 = vsel %vm144, 1, 0
    %v161 = vcvt.s32.f32 %v145
    %v162 = vcvt.s32.f32 %v146
    %v163 = vcvt.s32.f32 %v147
    %v164 = vcvt.s32.f32 %v148
    %v165 = vcvt.s32.f32 %v149
    %v166 = vcvt.s32.f32 %v150
    %v167 = vcvt.s32.f32 %v151
    %v168 = vcvt.s32.f32 %v152
    %v169 = vcvt.s32.f32 %v153
    %v170 = vcvt.s32.f32 %v154
    %v171 = vcvt.s32.f32 %v155
    %v172 = vcvt.s32.f32 %v156
    %v173 = vcvt.s32.f32 %v157
    %v174 = vcvt.s32.f32 %v158
    %v175 = vcvt.s32.f32 %v159
    %v176 = vcvt.s32.f32 %v160
    %v177 = vadd.f32 %v109, %v161
    %v178 = vadd.f32 %v110, %v162
    %v179 = vadd.f32 %v111, %v163
    %v180 = vadd.f32 %v112, %v164
    %v181 = vadd.f32 %v113, %v165
    %v182 = vadd.f32 %v114, %v166
    %v183 = vadd.f32 %v115, %v167
    %v184 = vadd.f32 %v116, %v168
    %v185 = vadd.f32 %v117, %v169
    %v186 = vadd.f32 %v118, %v170
    %v187 = vadd.f32 %v119, %v171
    %v188 = vadd.f32 %v120, %v172
    %v189 = vadd.f32 %v121, %v173
    %v190 = vadd.f32 %v122, %v174
    %v191 = vadd.f32 %v123, %v175
    %v192 = vadd.f32 %v124, %v176
    %v193 = vlaneseq
    %v194 = vshrl.u32 %v193, 7
    %v195 = vsub.s32 2, %v194
    %v196 = vrot.slane %v38, %v195
    %vm197 = vcmp.eq.s32.totalorder %v41, %v196
    %vm198 = vcmp.eq.s32.totalorder %v42, %v196
    %vm199 = vcmp.eq.s32.totalorder %v43, %v196
    %vm200 = vcmp.eq.s32.totalorder %v44, %v196
    %vm201 = vcmp.eq.s32.totalorder %v45, %v196
    %vm202 = vcmp.eq.s32.totalorder %v46, %v196
    %vm203 = vcmp.eq.s32.totalorder %v47, %v196
    %vm204 = vcmp.eq.s32.totalorder %v48, %v196
    %vm205 = vcmp.eq.s32.totalorder %v49, %v196
    %vm206 = vcmp.eq.s32.totalorder %v50, %v196
    %vm207 = vcmp.eq.s32.totalorder %v51, %v196
    %vm208 = vcmp.eq.s32.totalorder %v52, %v196
    %vm209 = vcmp.eq.s32.totalorder %v53, %v196
    %vm210 = vcmp.eq.s32.totalorder %v54, %v196
    %vm211 = vcmp.eq.s32.totalorder %v55, %v196
    %vm212 = vcmp.eq.s32.totalorder %v56, %v196
    %v213 = vsel %vm197, 1, 0
    %v214 = vsel %vm198, 1, 0
    %v215 = vsel %vm199, 1, 0
    %v216 = vsel %vm200, 1, 0
    %v217 = vsel %vm201, 1, 0
    %v218 = vsel %vm202, 1, 0
    %v219 = vsel %vm203, 1, 0
    %v220 = vsel %vm204, 1, 0
    %v221 = vsel %vm205, 1, 0
    %v222 = vsel %vm206, 1, 0
    %v223 = vsel %vm207, 1, 0
    %v224 = vsel %vm208, 1, 0
    %v225 = vsel %vm209, 1, 0
    %v226 = vsel %vm210, 1, 0
    %v227 = vsel %vm211, 1, 0
    %v228 = vsel %vm212, 1, 0
    %v229 = vcvt.s32.f32 %v213
    %v230 = vcvt.s32.f32 %v214
    %v231 = vcvt.s32.f32 %v215
    %v232 = vcvt.s32.f32 %v216
    %v233 = vcvt.s32.f32 %v217
    %v234 = vcvt.s32.f32 %v218
    %v235 = vcvt.s32.f32 %v219
    %v236 = vcvt.s32.f32 %v220
    %v237 = vcvt.s32.f32 %v221
    %v238 = vcvt.s32.f32 %v222
    %v239 = vcvt.s32.f32 %v223
    %v240 = vcvt.s32.f32 %v224
    %v241 = vcvt.s32.f32 %v225
    %v242 = vcvt.s32.f32 %v226
    %v243 = vcvt.s32.f32 %v227
    %v244 = vcvt.s32.f32 %v228
    %v245 = vadd.f32 %v177, %v229
    %v246 = vadd.f32 %v178, %v230
    %v247 = vadd.f32 %v179, %v231
    %v248 = vadd.f32 %v180, %v232
    %v249 = vadd.f32 %v181, %v233
    %v250 = vadd.f32 %v182, %v234
    %v251 = vadd.f32 %v183, %v235
    %v252 = vadd.f32 %v184, %v236
    %v253 = vadd.f32 %v185, %v237
    %v254 = vadd.f32 %v186, %v238
    %v255 = vadd.f32 %v187, %v239
    %v256 = vadd.f32 %v188, %v240
    %v257 = vadd.f32 %v189, %v241
    %v258 = vadd.f32 %v190, %v242
    %v259 = vadd.f32 %v191, %v243
    %v260 = vadd.f32 %v192, %v244
    %v261 = vlaneseq
    %v262 = vshrl.u32 %v261, 7
    %v263 = vsub.s32 3, %v262
    %v264 = vrot.slane %v38, %v263
    %vm265 = vcmp.eq.s32.totalorder %v41, %v264
    %vm266 = vcmp.eq.s32.totalorder %v42, %v264
    %vm267 = vcmp.eq.s32.totalorder %v43, %v264
    %vm268 = vcmp.eq.s32.totalorder %v44, %v264
    %vm269 = vcmp.eq.s32.totalorder %v45, %v264
    %vm270 = vcmp.eq.s32.totalorder %v46, %v264
    %vm271 = vcmp.eq.s32.totalorder %v47, %v264
    %vm272 = vcmp.eq.s32.totalorder %v48, %v264
    %vm273 = vcmp.eq.s32.totalorder %v49, %v264
    %vm274 = vcmp.eq.s32.totalorder %v50, %v264
    %vm275 = vcmp.eq.s32.totalorder %v51, %v264
    %vm276 = vcmp.eq.s32.totalorder %v52, %v264
    %vm277 = vcmp.eq.s32.totalorder %v53, %v264
    %vm278 = vcmp.eq.s32.totalorder %v54, %v264
    %vm279 = vcmp.eq.s32.totalorder %v55, %v264
    %vm280 = vcmp.eq.s32.totalorder %v56, %v264
    %v281 = vsel %vm265, 1, 0
    %v282 = vsel %vm266, 1, 0
    %v283 = vsel %vm267, 1, 0
    %v284 = vsel %vm268, 1, 0
    %v285 = vsel %vm269, 1, 0
    %v286 = vsel %vm270, 1, 0
    %v287 = vsel %vm271, 1, 0
    %v288 = vsel %vm272, 1, 0
    %v289 = vsel %vm273, 1, 0
    %v290 = vsel %vm274, 1, 0
    %v291 = vsel %vm275, 1, 0
    %v292 = vsel %vm276, 1, 0
    %v293 = vsel %vm277, 1, 0
    %v294 = vsel %vm278, 1, 0
    %v295 = vsel %vm279, 1, 0
    %v296 = vsel %vm280, 1, 0
    %v297 = vcvt.s32.f32 %v281
    %v298 = vcvt.s32.f32 %v282
    %v299 = vcvt.s32.f32 %v283
    %v300 = vcvt.s32.f32 %v284
    %v301 = vcvt.s32.f32 %v285
    %v302 = vcvt.s32.f32 %v286
    %v303 = vcvt.s32.f32 %v287
    %v304 = vcvt.s32.f32 %v288
    %v305 = vcvt.s32.f32 %v289
    %v306 = vcvt.s32.f32 %v290
    %v307 = vcvt.s32.f32 %v291
    %v308 = vcvt.s32.f32 %v292
    %v309 = vcvt.s32.f32 %v293
    %v310 = vcvt.s32.f32 %v294
    %v311 = vcvt.s32.f32 %v295
    %v312 = vcvt.s32.f32 %v296
    %v313 = vadd.f32 %v245, %v297
    %v314 = vadd.f32 %v246, %v298
    %v315 = vadd.f32 %v247, %v299
    %v316 = vadd.f32 %v248, %v300
    %v317 = vadd.f32 %v249, %v301
    %v318 = vadd.f32 %v250, %v302
    %v319 = vadd.f32 %v251, %v303
    %v320 = vadd.f32 %v252, %v304
    %v321 = vadd.f32 %v253, %v305
    %v322 = vadd.f32 %v254, %v306
    %v323 = vadd.f32 %v255, %v307
    %v324 = vadd.f32 %v256, %v308
    %v325 = vadd.f32 %v257, %v309
    %v326 = vadd.f32 %v258, %v310
    %v327 = vadd.f32 %v259, %v311
    %v328 = vadd.f32 %v260, %v312
    %v329 = vlaneseq
    %v330 = vshrl.u32 %v329, 7
    %v331 = vsub.s32 4, %v330
    %v332 = vrot.slane %v38, %v331
    %vm333 = vcmp.eq.s32.totalorder %v41, %v332
    %vm334 = vcmp.eq.s32.totalorder %v42, %v332
    %vm335 = vcmp.eq.s32.totalorder %v43, %v332
    %vm336 = vcmp.eq.s32.totalorder %v44, %v332
    %vm337 = vcmp.eq.s32.totalorder %v45, %v332
    %vm338 = vcmp.eq.s32.totalorder %v46, %v332
    %vm339 = vcmp.eq.s32.totalorder %v47, %v332
    %vm340 = vcmp.eq.s32.totalorder %v48, %v332
    %vm341 = vcmp.eq.s32.totalorder %v49, %v332
    %vm342 = vcmp.eq.s32.totalorder %v50, %v332
    %vm343 = vcmp.eq.s32.totalorder %v51, %v332
    %vm344 = vcmp.eq.s32.totalorder %v52, %v332
    %vm345 = vcmp.eq.s32.totalorder %v53, %v332
    %vm346 = vcmp.eq.s32.totalorder %v54, %v332
    %vm347 = vcmp.eq.s32.totalorder %v55, %v332
    %vm348 = vcmp.eq.s32.totalorder %v56, %v332
    %v349 = vsel %vm333, 1, 0
    %v350 = vsel %vm334, 1, 0
    %v351 = vsel %vm335, 1, 0
    %v352 = vsel %vm336, 1, 0
    %v353 = vsel %vm337, 1, 0
    %v354 = vsel %vm338, 1, 0
    %v355 = vsel %vm339, 1, 0
    %v356 = vsel %vm340, 1, 0
    %v357 = vsel %vm341, 1, 0
    %v358 = vsel %vm342, 1, 0
    %v359 = vsel %vm343, 1, 0
    %v360 = vsel %vm344, 1, 0
    %v361 = vsel %vm345, 1, 0
    %v362 = vsel %vm346, 1, 0
    %v363 = vsel %vm347, 1, 0
    %v364 = vsel %vm348, 1, 0
    %v365 = vcvt.s32.f32 %v349
    %v366 = vcvt.s32.f32 %v350
    %v367 = vcvt.s32.f32 %v351
    %v368 = vcvt.s32.f32 %v352
    %v369 = vcvt.s32.f32 %v353
    %v370 = vcvt.s32.f32 %v354
    %v371 = vcvt.s32.f32 %v355
    %v372 = vcvt.s32.f32 %v356
    %v373 = vcvt.s32.f32 %v357
    %v374 = vcvt.s32.f32 %v358
    %v375 = vcvt.s32.f32 %v359
    %v376 = vcvt.s32.f32 %v360
    %v377 = vcvt.s32.f32 %v361
    %v378 = vcvt.s32.f32 %v362
    %v379 = vcvt.s32.f32 %v363
    %v380 = vcvt.s32.f32 %v364
    %v381 = vadd.f32 %v313, %v365
    %v382 = vadd.f32 %v314, %v366
    %v383 = vadd.f32 %v315, %v367
    %v384 = vadd.f32 %v316, %v368
    %v385 = vadd.f32 %v317, %v369
    %v386 = vadd.f32 %v318, %v370
    %v387 = vadd.f32 %v319, %v371
    %v388 = vadd.f32 %v320, %v372
    %v389 = vadd.f32 %v321, %v373
    %v390 = vadd.f32 %v322, %v374
    %v391 = vadd.f32 %v323, %v375
    %v392 = vadd.f32 %v324, %v376
    %v393 = vadd.f32 %v325, %v377
    %v394 = vadd.f32 %v326, %v378
    %v395 = vadd.f32 %v327, %v379
    %v396 = vadd.f32 %v328, %v380
    %v397 = vlaneseq
    %v398 = vshrl.u32 %v397, 7
    %v399 = vsub.s32 5, %v398
    %v400 = vrot.slane %v38, %v399
    %vm401 = vcmp.eq.s32.totalorder %v41, %v400
    %vm402 = vcmp.eq.s32.totalorder %v42, %v400
    %vm403 = vcmp.eq.s32.totalorder %v43, %v400
    %vm404 = vcmp.eq.s32.totalorder %v44, %v400
    %vm405 = vcmp.eq.s32.totalorder %v45, %v400
    %vm406 = vcmp.eq.s32.totalorder %v46, %v400
    %vm407 = vcmp.eq.s32.totalorder %v47, %v400
    %vm408 = vcmp.eq.s32.totalorder %v48, %v400
    %vm409 = vcmp.eq.s32.totalorder %v49, %v400
    %vm410 = vcmp.eq.s32.totalorder %v50, %v400
    %vm411 = vcmp.eq.s32.totalorder %v51, %v400
    %vm412 = vcmp.eq.s32.totalorder %v52, %v400
    %vm413 = vcmp.eq.s32.totalorder %v53, %v400
    %vm414 = vcmp.eq.s32.totalorder %v54, %v400
    %vm415 = vcmp.eq.s32.totalorder %v55, %v400
    %vm416 = vcmp.eq.s32.totalorder %v56, %v400
    %v417 = vsel %vm401, 1, 0
    %v418 = vsel %vm402, 1, 0
    %v419 = vsel %vm403, 1, 0
    %v420 = vsel %vm404, 1, 0
    %v421 = vsel %vm405, 1, 0
    %v422 = vsel %vm406, 1, 0
    %v423 = vsel %vm407, 1, 0
    %v424 = vsel %vm408, 1, 0
    %v425 = vsel %vm409, 1, 0
    %v426 = vsel %vm410, 1, 0
    %v427 = vsel %vm411, 1, 0
    %v428 = vsel %vm412, 1, 0
    %v429 = vsel %vm413, 1, 0
    %v430 = vsel %vm414, 1, 0
    %v431 = vsel %vm415, 1, 0
    %v432 = vsel %vm416, 1, 0
    %v433 = vcvt.s32.f32 %v417
    %v434 = vcvt.s32.f32 %v418
    %v435 = vcvt.s32.f32 %v419
    %v436 = vcvt.s32.f32 %v420
    %v437 = vcvt.s32.f32 %v421
    %v438 = vcvt.s32.f32 %v422
    %v439 = vcvt.s32.f32 %v423
    %v440 = vcvt.s32.f32 %v424
    %v441 = vcvt.s32.f32 %v425
    %v442 = vcvt.s32.f32 %v426
    %v443 = vcvt.s32.f32 %v427
    %v444 = vcvt.s32.f32 %v428
    %v445 = vcvt.s32.f32 %v429
    %v446 = vcvt.s32.f32 %v430
    %v447 = vcvt.s32.f32 %v431
    %v448 = vcvt.s32.f32 %v432
    %v449 = vadd.f32 %v381, %v433
    %v450 = vadd.f32 %v382, %v434
    %v451 = vadd.f32 %v383, %v435
    %v452 = vadd.f32 %v384, %v436
    %v453 = vadd.f32 %v385, %v437
    %v454 = vadd.f32 %v386, %v438
    %v455 = vadd.f32 %v387, %v439
    %v456 = vadd.f32 %v388, %v440
    %v457 = vadd.f32 %v389, %v441
    %v458 = vadd.f32 %v390, %v442
    %v459 = vadd.f32 %v391, %v443
    %v460 = vadd.f32 %v392, %v444
    %v461 = vadd.f32 %v393, %v445
    %v462 = vadd.f32 %v394, %v446
    %v463 = vadd.f32 %v395, %v447
    %v464 = vadd.f32 %v396, %v448
    %v465 = vlaneseq
    %v466 = vshrl.u32 %v465, 7
    %v467 = vsub.s32 6, %v466
    %v468 = vrot.slane %v38, %v467
    %vm469 = vcmp.eq.s32.totalorder %v41, %v468
    %vm470 = vcmp.eq.s32.totalorder %v42, %v468
    %vm471 = vcmp.eq.s32.totalorder %v43, %v468
    %vm472 = vcmp.eq.s32.totalorder %v44, %v468
    %vm473 = vcmp.eq.s32.totalorder %v45, %v468
    %vm474 = vcmp.eq.s32.totalorder %v46, %v468
    %vm475 = vcmp.eq.s32.totalorder %v47, %v468
    %vm476 = vcmp.eq.s32.totalorder %v48, %v468
    %vm477 = vcmp.eq.s32.totalorder %v49, %v468
    %vm478 = vcmp.eq.s32.totalorder %v50, %v468
    %vm479 = vcmp.eq.s32.totalorder %v51, %v468
    %vm480 = vcmp.eq.s32.totalorder %v52, %v468
    %vm481 = vcmp.eq.s32.totalorder %v53, %v468
    %vm482 = vcmp.eq.s32.totalorder %v54, %v468
    %vm483 = vcmp.eq.s32.totalorder %v55, %v468
    %vm484 = vcmp.eq.s32.totalorder %v56, %v468
    %v485 = vsel %vm469, 1, 0
    %v486 = vsel %vm470, 1, 0
    %v487 = vsel %vm471, 1, 0
    %v488 = vsel %vm472, 1, 0
    %v489 = vsel %vm473, 1, 0
    %v490 = vsel %vm474, 1, 0
    %v491 = vsel %vm475, 1, 0
    %v492 = vsel %vm476, 1, 0
    %v493 = vsel %vm477, 1, 0
    %v494 = vsel %vm478, 1, 0
    %v495 = vsel %vm479, 1, 0
    %v496 = vsel %vm480, 1, 0
    %v497 = vsel %vm481, 1, 0
    %v498 = vsel %vm482, 1, 0
    %v499 = vsel %vm483, 1, 0
    %v500 = vsel %vm484, 1, 0
    %v501 = vcvt.s32.f32 %v485
    %v502 = vcvt.s32.f32 %v486
    %v503 = vcvt.s32.f32 %v487
    %v504 = vcvt.s32.f32 %v488
    %v505 = vcvt.s32.f32 %v489
    %v506 = vcvt.s32.f32 %v490
    %v507 = vcvt.s32.f32 %v491
    %v508 = vcvt.s32.f32 %v492
    %v509 = vcvt.s32.f32 %v493
    %v510 = vcvt.s32.f32 %v494
    %v511 = vcvt.s32.f32 %v495
    %v512 = vcvt.s32.f32 %v496
    %v513 = vcvt.s32.f32 %v497
    %v514 = vcvt.s32.f32 %v498
    %v515 = vcvt.s32.f32 %v499
    %v516 = vcvt.s32.f32 %v500
    %v517 = vadd.f32 %v449, %v501
    %v518 = vadd.f32 %v450, %v502
    %v519 = vadd.f32 %v451, %v503
    %v520 = vadd.f32 %v452, %v504
    %v521 = vadd.f32 %v453, %v505
    %v522 = vadd.f32 %v454, %v506
    %v523 = vadd.f32 %v455, %v507
    %v524 = vadd.f32 %v456, %v508
    %v525 = vadd.f32 %v457, %v509
    %v526 = vadd.f32 %v458, %v510
    %v527 = vadd.f32 %v459, %v511
    %v528 = vadd.f32 %v460, %v512
    %v529 = vadd.f32 %v461, %v513
    %v530 = vadd.f32 %v462, %v514
    %v531 = vadd.f32 %v463, %v515
    %v532 = vadd.f32 %v464, %v516
    %v533 = vlaneseq
    %v534 = vshrl.u32 %v533, 7
    %v535 = vsub.s32 7, %v534
    %v536 = vrot.slane %v38, %v535
    %vm537 = vcmp.eq.s32.totalorder %v41, %v536
    %vm538 = vcmp.eq.s32.totalorder %v42, %v536
    %vm539 = vcmp.eq.s32.totalorder %v43, %v536
    %vm540 = vcmp.eq.s32.totalorder %v44, %v536
    %vm541 = vcmp.eq.s32.totalorder %v45, %v536
    %vm542 = vcmp.eq.s32.totalorder %v46, %v536
    %vm543 = vcmp.eq.s32.totalorder %v47, %v536
    %vm544 = vcmp.eq.s32.totalorder %v48, %v536
    %vm545 = vcmp.eq.s32.totalorder %v49, %v536
    %vm546 = vcmp.eq.s32.totalorder %v50, %v536
    %vm547 = vcmp.eq.s32.totalorder %v51, %v536
    %vm548 = vcmp.eq.s32.totalorder %v52, %v536
    %vm549 = vcmp.eq.s32.totalorder %v53, %v536
    %vm550 = vcmp.eq.s32.totalorder %v54, %v536
    %vm551 = vcmp.eq.s32.totalorder %v55, %v536
    %vm552 = vcmp.eq.s32.totalorder %v56, %v536
    %v553 = vsel %vm537, 1, 0
    %v554 = vsel %vm538, 1, 0
    %v555 = vsel %vm539, 1, 0
    %v556 = vsel %vm540, 1, 0
    %v557 = vsel %vm541, 1, 0
    %v558 = vsel %vm542, 1, 0
    %v559 = vsel %vm543, 1, 0
    %v560 = vsel %vm544, 1, 0
    %v561 = vsel %vm545, 1, 0
    %v562 = vsel %vm546, 1, 0
    %v563 = vsel %vm547, 1, 0
    %v564 = vsel %vm548, 1, 0
    %v565 = vsel %vm549, 1, 0
    %v566 = vsel %vm550, 1, 0
    %v567 = vsel %vm551, 1, 0
    %v568 = vsel %vm552, 1, 0
    %v569 = vcvt.s32.f32 %v553
    %v570 = vcvt.s32.f32 %v554
    %v571 = vcvt.s32.f32 %v555
    %v572 = vcvt.s32.f32 %v556
    %v573 = vcvt.s32.f32 %v557
    %v574 = vcvt.s32.f32 %v558
    %v575 = vcvt.s32.f32 %v559
    %v576 = vcvt.s32.f32 %v560
    %v577 = vcvt.s32.f32 %v561
    %v578 = vcvt.s32.f32 %v562
    %v579 = vcvt.s32.f32 %v563
    %v580 = vcvt.s32.f32 %v564
    %v581 = vcvt.s32.f32 %v565
    %v582 = vcvt.s32.f32 %v566
    %v583 = vcvt.s32.f32 %v567
    %v584 = vcvt.s32.f32 %v568
    %v585 = vadd.f32 %v517, %v569
    %v586 = vadd.f32 %v518, %v570
    %v587 = vadd.f32 %v519, %v571
    %v588 = vadd.f32 %v520, %v572
    %v589 = vadd.f32 %v521, %v573
    %v590 = vadd.f32 %v522, %v574
    %v591 = vadd.f32 %v523, %v575
    %v592 = vadd.f32 %v524, %v576
    %v593 = vadd.f32 %v525, %v577
    %v594 = vadd.f32 %v526, %v578
    %v595 = vadd.f32 %v527, %v579
    %v596 = vadd.f32 %v528, %v580
    %v597 = vadd.f32 %v529, %v581
    %v598 = vadd.f32 %v530, %v582
    %v599 = vadd.f32 %v531, %v583
    %v600 = vadd.f32 %v532, %v584
    %v601 = vlaneseq
    %v602 = vshrl.u32 %v601, 7
    %v603 = vsub.s32 0, %v602
    %v604 = vrot.slane %v39, %v603
    %vm605 = vcmp.eq.s32.totalorder %v41, %v604
    %vm606 = vcmp.eq.s32.totalorder %v42, %v604
    %vm607 = vcmp.eq.s32.totalorder %v43, %v604
    %vm608 = vcmp.eq.s32.totalorder %v44, %v604
    %vm609 = vcmp.eq.s32.totalorder %v45, %v604
    %vm610 = vcmp.eq.s32.totalorder %v46, %v604
    %vm611 = vcmp.eq.s32.totalorder %v47, %v604
    %vm612 = vcmp.eq.s32.totalorder %v48, %v604
    %vm613 = vcmp.eq.s32.totalorder %v49, %v604
    %vm614 = vcmp.eq.s32.totalorder %v50, %v604
    %vm615 = vcmp.eq.s32.totalorder %v51, %v604
    %vm616 = vcmp.eq.s32.totalorder %v52, %v604
    %vm617 = vcmp.eq.s32.totalorder %v53, %v604
    %vm618 = vcmp.eq.s32.totalorder %v54, %v604
    %vm619 = vcmp.eq.s32.totalorder %v55, %v604
    %vm620 = vcmp.eq.s32.totalorder %v56, %v604
    %v621 = vsel %vm605, 1, 0
    %v622 = vsel %vm606, 1, 0
    %v623 = vsel %vm607, 1, 0
    %v624 = vsel %vm608, 1, 0
    %v625 = vsel %vm609, 1, 0
    %v626 = vsel %vm610, 1, 0
    %v627 = vsel %vm611, 1, 0
    %v628 = vsel %vm612, 1, 0
    %v629 = vsel %vm613, 1, 0
    %v630 = vsel %vm614, 1, 0
    %v631 = vsel %vm615, 1, 0
    %v632 = vsel %vm616, 1, 0
    %v633 = vsel %vm617, 1, 0
    %v634 = vsel %vm618, 1, 0
    %v635 = vsel %vm619, 1, 0
    %v636 = vsel %vm620, 1, 0
    %v637 = vcvt.s32.f32 %v621
    %v638 = vcvt.s32.f32 %v622
    %v639 = vcvt.s32.f32 %v623
    %v640 = vcvt.s32.f32 %v624
    %v641 = vcvt.s32.f32 %v625
    %v642 = vcvt.s32.f32 %v626
    %v643 = vcvt.s32.f32 %v627
    %v644 = vcvt.s32.f32 %v628
    %v645 = vcvt.s32.f32 %v629
    %v646 = vcvt.s32.f32 %v630
    %v647 = vcvt.s32.f32 %v631
    %v648 = vcvt.s32.f32 %v632
    %v649 = vcvt.s32.f32 %v633
    %v650 = vcvt.s32.f32 %v634
    %v651 = vcvt.s32.f32 %v635
    %v652 = vcvt.s32.f32 %v636
    %v653 = vadd.f32 %v585, %v637
    %v654 = vadd.f32 %v586, %v638
    %v655 = vadd.f32 %v587, %v639
    %v656 = vadd.f32 %v588, %v640
    %v657 = vadd.f32 %v589, %v641
    %v658 = vadd.f32 %v590, %v642
    %v659 = vadd.f32 %v591, %v643
    %v660 = vadd.f32 %v592, %v644
    %v661 = vadd.f32 %v593, %v645
    %v662 = vadd.f32 %v594, %v646
    %v663 = vadd.f32 %v595, %v647
    %v664 = vadd.f32 %v596, %v648
    %v665 = vadd.f32 %v597, %v649
    %v666 = vadd.f32 %v598, %v650
    %v667 = vadd.f32 %v599, %v651
    %v668 = vadd.f32 %v600, %v652
    %v669 = vlaneseq
    %v670 = vshrl.u32 %v669, 7
    %v671 = vsub.s32 1, %v670
    %v672 = vrot.slane %v39, %v671
    %vm673 = vcmp.eq.s32.totalorder %v41, %v672
    %vm674 = vcmp.eq.s32.totalorder %v42, %v672
    %vm675 = vcmp.eq.s32.totalorder %v43, %v672
    %vm676 = vcmp.eq.s32.totalorder %v44, %v672
    %vm677 = vcmp.eq.s32.totalorder %v45, %v672
    %vm678 = vcmp.eq.s32.totalorder %v46, %v672
    %vm679 = vcmp.eq.s32.totalorder %v47, %v672
    %vm680 = vcmp.eq.s32.totalorder %v48, %v672
    %vm681 = vcmp.eq.s32.totalorder %v49, %v672
    %vm682 = vcmp.eq.s32.totalorder %v50, %v672
    %vm683 = vcmp.eq.s32.totalorder %v51, %v672
    %vm684 = vcmp.eq.s32.totalorder %v52, %v672
    %vm685 = vcmp.eq.s32.totalorder %v53, %v672
    %vm686 = vcmp.eq.s32.totalorder %v54, %v672
    %vm687 = vcmp.eq.s32.totalorder %v55, %v672
    %vm688 = vcmp.eq.s32.totalorder %v56, %v672
    %v689 = vsel %vm673, 1, 0
    %v690 = vsel %vm674, 1, 0
    %v691 = vsel %vm675, 1, 0
    %v692 = vsel %vm676, 1, 0
    %v693 = vsel %vm677, 1, 0
    %v694 = vsel %vm678, 1, 0
    %v695 = vsel %vm679, 1, 0
    %v696 = vsel %vm680, 1, 0
    %v697 = vsel %vm681, 1, 0
    %v698 = vsel %vm682, 1, 0
    %v699 = vsel %vm683, 1, 0
    %v700 = vsel %vm684, 1, 0
    %v701 = vsel %vm685, 1, 0
    %v702 = vsel %vm686, 1, 0
    %v703 = vsel %vm687, 1, 0
    %v704 = vsel %vm688, 1, 0
    %v705 = vcvt.s32.f32 %v689
    %v706 = vcvt.s32.f32 %v690
    %v707 = vcvt.s32.f32 %v691
    %v708 = vcvt.s32.f32 %v692
    %v709 = vcvt.s32.f32 %v693
    %v710 = vcvt.s32.f32 %v694
    %v711 = vcvt.s32.f32 %v695
    %v712 = vcvt.s32.f32 %v696
    %v713 = vcvt.s32.f32 %v697
    %v714 = vcvt.s32.f32 %v698
    %v715 = vcvt.s32.f32 %v699
    %v716 = vcvt.s32.f32 %v700
    %v717 = vcvt.s32.f32 %v701
    %v718 = vcvt.s32.f32 %v702
    %v719 = vcvt.s32.f32 %v703
    %v720 = vcvt.s32.f32 %v704
    %v721 = vadd.f32 %v653, %v705
    %v722 = vadd.f32 %v654, %v706
    %v723 = vadd.f32 %v655, %v707
    %v724 = vadd.f32 %v656, %v708
    %v725 = vadd.f32 %v657, %v709
    %v726 = vadd.f32 %v658, %v710
    %v727 = vadd.f32 %v659, %v711
    %v728 = vadd.f32 %v660, %v712
    %v729 = vadd.f32 %v661, %v713
    %v730 = vadd.f32 %v662, %v714
    %v731 = vadd.f32 %v663, %v715
    %v732 = vadd.f32 %v664, %v716
    %v733 = vadd.f32 %v665, %v717
    %v734 = vadd.f32 %v666, %v718
    %v735 = vadd.f32 %v667, %v719
    %v736 = vadd.f32 %v668, %v720
    %v737 = vld [vmem:[#allocation5] sm:$0xff]
    %738 = vmatprep.subr.mxu0 0.0
    %739 = vmatpush1.msra.mxu0 %v721
    %740 = vmatprep.subr.mxu0 0.0
    %741 = vmatpush1.msra.mxu0 %v722
    %742 = vmatprep.subr.mxu0 0.0
    %743 = vmatpush1.msra.mxu0 %v723
    %744 = vmatprep.subr.mxu0 0.0
    %745 = vmatpush1.msra.mxu0 %v724
    %746 = vmatprep.subr.mxu0 0.0
    %747 = vmatpush1.msra.mxu0 %v725
    %748 = vmatprep.subr.mxu0 0.0
    %749 = vmatpush1.msra.mxu0 %v726
    %750 = vmatprep.subr.mxu0 0.0
    %751 = vmatpush1.msra.mxu0 %v727
    %752 = vmatprep.subr.mxu0 0.0
    %753 = vmatpush1.msra.mxu0 %v728
    %754 = vmatprep.subr.mxu0 0.0
    %755 = vmatpush1.msra.mxu0 %v729
    %756 = vmatprep.subr.mxu0 0.0
    %757 = vmatpush1.msra.mxu0 %v730
    %758 = vmatprep.subr.mxu0 0.0
    %759 = vmatpush1.msra.mxu0 %v731
    %760 = vmatprep.subr.mxu0 0.0
    %761 = vmatpush1.msra.mxu0 %v732
    %762 = vmatprep.subr.mxu0 0.0
    %763 = vmatpush1.msra.mxu0 %v733
    %764 = vmatprep.subr.mxu0 0.0
    %765 = vmatpush1.msra.mxu0 %v734
    %766 = vmatprep.subr.mxu0 0.0
    %767 = vmatpush1.msra.mxu0 %v735
    %768 = vmatprep.subr.mxu0 0.0
    %769 = vmatpush1.msra.mxu0 %v736
    %770 = vmatprep.subr.mxu0 0.0
    %771 = vmatpush1.msra.mxu0 0.0
    %772 = vmatprep.subr.mxu0 0.0
    %773 = vmatpush1.msra.mxu0 0.0
    %774 = vmatprep.subr.mxu0 0.0
    %775 = vmatpush1.msra.mxu0 0.0
    %776 = vmatprep.subr.mxu0 0.0
    %777 = vmatpush1.msra.mxu0 0.0
    %778 = vmatprep.subr.mxu0 0.0
    %779 = vmatpush1.msra.mxu0 0.0
    %780 = vmatprep.subr.mxu0 0.0
    %781 = vmatpush1.msra.mxu0 0.0
    %782 = vmatprep.subr.mxu0 0.0
    %783 = vmatpush1.msra.mxu0 0.0
    %784 = vmatprep.subr.mxu0 0.0
    %785 = vmatpush1.msra.mxu0 0.0
    %786 = vmatprep.subr.mxu0 0.0
    %787 = vmatpush1.msra.mxu0 0.0
    %788 = vmatprep.subr.mxu0 0.0
    %789 = vmatpush1.msra.mxu0 0.0
    %790 = vmatprep.subr.mxu0 0.0
    %791 = vmatpush1.msra.mxu0 0.0
    %792 = vmatprep.subr.mxu0 0.0
    %793 = vmatpush1.msra.mxu0 0.0
    %794 = vmatprep.subr.mxu0 0.0
    %795 = vmatpush1.msra.mxu0 0.0
    %796 = vmatprep.subr.mxu0 0.0
    %797 = vmatpush1.msra.mxu0 0.0
    %798 = vmatprep.subr.mxu0 0.0
    %799 = vmatpush1.msra.mxu0 0.0
    %800 = vmatprep.subr.mxu0 0.0
    %801 = vmatpush1.msra.mxu0 0.0
    %802 = vmatprep.mubr.f32.mxu0 0.0
    %803 = vmatmul.mubr.f32.gmra.mrb[0].mxu0 %v737
    %v804 = vpop.f32.mrb[0].mxu0
    %v805 = vadd.f32 0.0, %v804
    %v806 = vpop.f32.mrb[0].mxu0
    %807 = vdwg.mxu0
    %v808 = vmul.f32 %v805, 0.1
    %809 = vst [vmem:[#allocation7] sm:$0xff] %v808
    // Predicated region
    $region18: #{tpu_custom_call.1} parent=1 // pred_check
      _
    $region19: #{tpu_custom_call.1} parent=1 // pred_check_branch
      %811 = sbr.rel (0) target = $region21
    $region20: #{tpu_custom_call.1} parent=1 // pred_region
      %s813 = ssub.s32 128, 128
      %814 = vsyncadd [#allocation4], %s813
      %s816 = sshll.u32 [#allocation7], 4
      %s817 = int_to_ptr.vmem [resolvable:$true] %s816
      %819 = dma.vmem_to_hbm [thread:$0]  %s817, 128, %s2, [#allocation4]
    $region21: #{tpu_custom_call.1} parent=1 // pred_fallthru
      _
    // Predicated region
    $region22: #{tpu_custom_call.1} parent=1 // pred_check
      _
    $region23: #{tpu_custom_call.1} parent=1 // pred_check_branch
      %821 = sbr.rel (0) target = $region25
    $region24: #{tpu_custom_call.1} parent=1 // pred_region
      %822 = dma.done [#allocation4], 128
    $region25: #{tpu_custom_call.1} parent=1 // pred_fallthru
      _
    %823 = vsyncpa [#allocation3], 1
    %824 = vsyncpa [#allocation6], 1
    %825 = vsyncpa [#allocation4], 1

</llo_original>
